<compile_context>
chip_gen: v6e
topology: v6e:2x2x1
jax: 0.10.0
libtpu: 0.0.40
codegen_flags: <defaults>
</compile_context>

<pallas_src>
import functools

import jax
import jax.numpy as jnp
from jax.experimental import pallas as pl
from jax.experimental.pallas import tpu as pltpu


def _round_up(x, m):
    return ((x + m - 1) // m) * m


def _gc_matmul_kernel(x_ref, a_ref, b_ref, o_ref, acc_ref):
    # x_ref  : (tm, tk) VMEM  rows = (batch*time), cols = K-slab of (in_feat*node_w)
    # a_ref  : (tk, tn) VMEM  folded-filter slab A[f*W+w, o*H+h]
    # b_ref  : (1,  tn) VMEM  bias repeated along h (f32)
    # o_ref  : (tm, tn) VMEM  output tile (f32)
    # acc_ref: (tm, tn) VMEM  f32 accumulator, resident across the K grid axis
    k = pl.program_id(2)

    @pl.when(k == 0)
    def _():
        acc_ref[...] = jnp.zeros_like(acc_ref)

    acc_ref[...] += jnp.dot(x_ref[...], a_ref[...],
                            preferred_element_type=jnp.float32)

    @pl.when(k == pl.num_programs(2) - 1)
    def _():
        o_ref[...] = (acc_ref[...] + b_ref[...]).astype(o_ref.dtype)


@functools.partial(jax.jit,
                   static_argnames=("compute_dtype", "tm_max", "tn_max",
                                    "tk_max", "vmem_budget"))
def graph_conv(inputs, supports, weight, bias, *,
               compute_dtype=jnp.bfloat16,
               tm_max=256, tn_max=256, tk_max=512,
               vmem_budget=24 * 1024 * 1024):
    B, F, W, T = inputs.shape
    K, H, _W = supports.shape
    O = weight.shape[-1]

    M, Kd, N = B * T, F * W, O * H
    in_item = jnp.dtype(compute_dtype).itemsize

    # ---------------- tile selection ----------------
    # rows: sublane granularity 16 (safe for bf16 packing). M > tm_max gives
    # >=2 "parallel" row blocks so v7x's two TensorCores split the work.
    M_p = _round_up(M, 16)
    tm = min(tm_max, M_p)

    # lanes: output must stay lane-dense (multiples of 128 -> unmasked vst).
    if _round_up(N, 128) <= max(tn_max, 512):
        tn = _round_up(N, 128)
        N_p = tn
    else:
        tn = tn_max
        N_p = _round_up(N, tn)

    # contraction: keep whole Kd per block while the double-buffered working
    # set fits the VMEM budget (then, with a single lane block, A is fetched
    # once and stays resident); otherwise tile K with a bounded slab.
    def _footprint(tk_):
        return (2 * (tm * tk_ + tk_ * tn) * in_item   # x, A blocks (double-buffered)
                + 2 * tn * 4                          # bias row
                + 2 * tm * tn * 4                     # output tile
                + tm * tn * 4)                        # f32 accumulator

    if _footprint(Kd) <= vmem_budget:
        tk, Kd_p = Kd, Kd
    else:
        tk = tk_max
        Kd_p = _round_up(Kd, tk)

    # ---------- wrapper-side layout plumbing + tiny K-fold (f32, then cast) ----------
    # A[f*W+w, o*H+h] = sum_k supports[k,h,w] * weight[k,f,o]
    a_mat = jnp.einsum('khw,kfo->fwoh',
                       supports.astype(jnp.float32),
                       weight.astype(jnp.float32)).reshape(Kd, N)
    a_mat = a_mat.astype(compute_dtype)
    # x_mat[b*T+t, f*W+w] = inputs[b,f,w,t]
    x_mat = inputs.transpose(0, 3, 1, 2).reshape(M, Kd).astype(compute_dtype)
    # bias_mat[0, o*H+h] = bias[o]   (kept f32; added to the f32 accumulator)
    bias_mat = jnp.repeat(bias.astype(jnp.float32), H).reshape(1, N)

    # zero-pad so tiles are dense and the K tail never enters the accumulator
    if (M_p, Kd_p) != (M, Kd):
        x_mat = jnp.pad(x_mat, ((0, M_p - M), (0, Kd_p - Kd)))
    if (Kd_p, N_p) != (Kd, N):
        a_mat = jnp.pad(a_mat, ((0, Kd_p - Kd), (0, N_p - N)))
    if N_p != N:
        bias_mat = jnp.pad(bias_mat, ((0, 0), (0, N_p - N)))

    grid = (pl.cdiv(M_p, tm), N_p // tn, Kd_p // tk)

    cost = pl.CostEstimate(
        flops=2 * M_p * N_p * Kd_p,
        bytes_accessed=(M_p * Kd_p + Kd_p * N_p) * in_item
        + (M_p * N_p + N_p) * 4,
        transcendentals=0)

    out_mat = pl.pallas_call(
        _gc_matmul_kernel,
        out_shape=jax.ShapeDtypeStruct((M_p, N_p), jnp.float32),
        grid_spec=pltpu.PrefetchScalarGridSpec(
            num_scalar_prefetch=0,
            grid=grid,
            in_specs=[
                pl.BlockSpec((tm, tk), lambda i, j, k: (i, k)),
                pl.BlockSpec((tk, tn), lambda i, j, k: (k, j)),
                pl.BlockSpec((1, tn), lambda i, j, k: (0, j)),
            ],
            out_specs=pl.BlockSpec((tm, tn), lambda i, j, k: (i, j)),
            scratch_shapes=[pltpu.VMEM((tm, tn), jnp.float32)],
        ),
        compiler_params=pltpu.CompilerParams(
            dimension_semantics=("parallel", "parallel", "arbitrary"),
            vmem_limit_bytes=32 * 1024 * 1024,
            allow_input_fusion=[True, True, True]),
        cost_estimate=cost,
    )(x_mat, a_mat, bias_mat)

    # (B*T, O*H) -> (B, T, O, H) -> (B, O, H, T)
    out = out_mat[:M, :N].reshape(B, T, O, H).transpose(0, 2, 3, 1)
    # TODO(synk): dropout is identity in eval mode; training-mode stochastic
    # dropout is not implemented in the kernel.
    return out


def reference(inputs, supports, weight, bias):
    aggr = jnp.einsum('khw,bfwt->bkfht', supports, inputs)
    out = jnp.einsum('bkfht,kfo->boht', aggr, weight)
    return out + bias[None, :, None, None]


if __name__ == "__main__":
    # small shapes: batch=2, input_size=4, output_size=8, num_matrices=3,
    # num_nodes=16, time=8
    B, F, O, K, N, T = 2, 4, 8, 3, 16, 8

    key = jax.random.PRNGKey(0)
    k_in, k_sup, k_w, k_b = jax.random.split(key, 4)

    inputs = jax.random.normal(k_in, (B, F, N, T), dtype=jnp.float32)
    supports = jax.random.normal(k_sup, (K, N, N), dtype=jnp.float32)

    # xavier_normal_(gain=1.414) on weight (K, F, O)
    gain = 1.414
    std = gain * (2.0 / (F * O + K * O)) ** 0.5
    weight = (std * jax.random.normal(k_w, (K, F, O))).astype(jnp.float32)
    # module inits bias to 0; use a nonzero bias to exercise the add path
    bias = (0.1 * jax.random.normal(k_b, (O,))).astype(jnp.float32)

    ref = reference(inputs, supports, weight, bias)

    # f32 MXU feed: tight check against the reference einsums
    out_f32 = jax.block_until_ready(
        graph_conv(inputs, supports, weight, bias, compute_dtype=jnp.float32))
    assert out_f32.shape == (B, O, N, T), out_f32.shape
    err_f32 = float(jnp.max(jnp.abs(out_f32 - ref)))
    assert jnp.allclose(out_f32, ref, atol=1e-4, rtol=1e-4), err_f32

    # default bf16 MXU feed (v6e/v7x native); f32 accumulate -> loose tolerance
    out_bf16 = jax.block_until_ready(graph_conv(inputs, supports, weight, bias))
    assert out_bf16.shape == (B, O, N, T), out_bf16.shape
    err_bf16 = float(jnp.max(jnp.abs(out_bf16 - ref)))
    assert jnp.allclose(out_bf16, ref, atol=1e-1, rtol=1e-2), err_bf16

    print("KERNEL_OK")
</pallas_src>

<mosaic_0001>
module attributes {stable_mosaic.version = 11 : i64} {
  func.func @_gc_matmul_kernel(%arg0: i32, %arg1: i32, %arg2: i32, %arg3: memref<16x64xf32, #tpu.memory_space<vmem>>, %arg4: memref<64x128xf32, #tpu.memory_space<vmem>>, %arg5: memref<1x128xf32, #tpu.memory_space<vmem>>, %arg6: memref<16x128xf32, #tpu.memory_space<vmem>>, %arg7: memref<16x128xf32, #tpu.memory_space<vmem>>) attributes {dimension_semantics = [#tpu.dimension_semantics<parallel>, #tpu.dimension_semantics<parallel>, #tpu.dimension_semantics<arbitrary>], iteration_bounds = array<i64: 1, 1, 1>, scalar_prefetch = 0 : i64, scratch_operands = 1 : i64, tpu.core_type = #tpu.core_type<tc>, window_params = [{transform_indices = @transform_0, window_bounds = array<i64: 16, 64>}, {transform_indices = @transform_1, window_bounds = array<i64: 64, 128>}, {transform_indices = @transform_2, window_bounds = array<i64: 1, 128>}, {transform_indices = @transform_3, window_bounds = array<i64: 16, 128>}]} {
    %c0_i32 = arith.constant 0 : i32
    %0 = arith.cmpi eq, %arg2, %c0_i32 : i32
    %1 = arith.extui %0 : i1 to i32
    %c0_i32_0 = arith.constant 0 : i32
    %2 = arith.cmpi ne, %1, %c0_i32_0 : i32
    scf.if %2 {
      %cst_10 = arith.constant 0.000000e+00 : f32
      %12 = vector.broadcast %cst_10 : f32 to vector<16x128xf32>
      %c0_11 = arith.constant 0 : index
      %c0_12 = arith.constant 0 : index
      %13 = vector.load %arg7[%c0_11, %c0_12] : memref<16x128xf32, #tpu.memory_space<vmem>>, vector<16x128xf32>
      tpu.vector_store %arg7[%c0_11, %c0_12], %12 {strides = array<i32>} : memref<16x128xf32, #tpu.memory_space<vmem>>, vector<16x128xf32>,
    } else {
    }
    %c0 = arith.constant 0 : index
    %c0_1 = arith.constant 0 : index
    %3 = vector.load %arg7[%c0, %c0_1] : memref<16x128xf32, #tpu.memory_space<vmem>>, vector<16x128xf32>
    %c0_2 = arith.constant 0 : index
    %c0_3 = arith.constant 0 : index
    %4 = vector.load %arg3[%c0_2, %c0_3] : memref<16x64xf32, #tpu.memory_space<vmem>>, vector<16x64xf32>
    %c0_4 = arith.constant 0 : index
    %c0_5 = arith.constant 0 : index
    %5 = vector.load %arg4[%c0_4, %c0_5] : memref<64x128xf32, #tpu.memory_space<vmem>>, vector<64x128xf32>
    %cst = arith.constant dense<0.000000e+00> : vector<16x128xf32>
    %6 = tpu.matmul %4, %5, %cst {dimension_numbers = #tpu.dot_dimension_numbers<[1], [0], [0], [1], [0, 0, 1, 1], [], []>} : vector<16x64xf32>, vector<64x128xf32>, vector<16x128xf32> -> vector<16x128xf32>
    %7 = arith.addf %3, %6 : vector<16x128xf32>
    %c0_6 = arith.constant 0 : index
    %c0_7 = arith.constant 0 : index
    %8 = vector.load %arg7[%c0_6, %c0_7] : memref<16x128xf32, #tpu.memory_space<vmem>>, vector<16x128xf32>
    tpu.vector_store %arg7[%c0_6, %c0_7], %7 {strides = array<i32>} : memref<16x128xf32, #tpu.memory_space<vmem>>, vector<16x128xf32>,
    %c0_i32_8 = arith.constant 0 : i32
    %9 = arith.cmpi eq, %arg2, %c0_i32_8 : i32
    %10 = arith.extui %9 : i1 to i32
    %c0_i32_9 = arith.constant 0 : i32
    %11 = arith.cmpi ne, %10, %c0_i32_9 : i32
    scf.if %11 {
      %c0_10 = arith.constant 0 : index
      %c0_11 = arith.constant 0 : index
      %12 = vector.load %arg7[%c0_10, %c0_11] : memref<16x128xf32, #tpu.memory_space<vmem>>, vector<16x128xf32>
      %c0_12 = arith.constant 0 : index
      %c0_13 = arith.constant 0 : index
      %13 = vector.load %arg5[%c0_12, %c0_13] : memref<1x128xf32, #tpu.memory_space<vmem>>, vector<1x128xf32>
      %14 = vector.broadcast %13 : vector<1x128xf32> to vector<16x128xf32>
      %15 = arith.addf %12, %14 : vector<16x128xf32>
      %c0_14 = arith.constant 0 : index
      %c0_15 = arith.constant 0 : index
      %16 = vector.load %arg6[%c0_14, %c0_15] : memref<16x128xf32, #tpu.memory_space<vmem>>, vector<16x128xf32>
      tpu.vector_store %arg6[%c0_14, %c0_15], %15 {strides = array<i32>} : memref<16x128xf32, #tpu.memory_space<vmem>>, vector<16x128xf32>,
    } else {
    }
    return
  }
  func.func @transform_0(%arg0: i32, %arg1: i32, %arg2: i32) -> (i32, i32) {
    %c0_i32 = arith.constant 0 : i32
    return %arg0, %arg2 : i32, i32
  }
  func.func @transform_1(%arg0: i32, %arg1: i32, %arg2: i32) -> (i32, i32) {
    %c0_i32 = arith.constant 0 : i32
    return %arg2, %arg1 : i32, i32
  }
  func.func @transform_2(%arg0: i32, %arg1: i32, %arg2: i32) -> (i32, i32) {
    %c0_i32 = arith.constant 0 : i32
    %c0_i32_0 = arith.constant 0 : i32
    return %c0_i32, %arg1 : i32, i32
  }
  func.func @transform_3(%arg0: i32, %arg1: i32, %arg2: i32) -> (i32, i32) {
    %c0_i32 = arith.constant 0 : i32
    return %arg0, %arg1 : i32, i32
  }
}

</mosaic_0001>

<llo_original>
// kernel: graph_conv.1
$region0: #{graph_conv.1}
  #allocation0 [shape = 'u32[]', space=smem, size = 0x4, offset = 0x4, fixed_abs, tag = 'smem constant byte address 0x4 - core index']
  #allocation1 [shape = 'u32[144,128]{1,0:T(1,128)}', space=vmem, size = 0x12000, scoped, tag = 'internal scratch']
  #allocation2 [shape = 'f32[16,128]{1,0:T(8,128)}', space=vmem, size = 0x2000, scoped, tag = 'scratch operand']
  %s0 = inlined_call_operand.vmem [shape: f32[16,64], index: 0, kind: input, shape index: {}]
  %s1 = inlined_call_operand.vmem [shape: f32[64,128], index: 1, kind: input, shape index: {}]
  %s2 = inlined_call_operand.vmem [shape: f32[1,128], index: 2, kind: input, shape index: {}]
  %s3 = inlined_call_operand.vmem [shape: f32[16,128], index: 3, kind: output, shape index: {}]
  %s4 = sld [smem:[#allocation0]]
  $region30: #{graph_conv.1} parent=0
    _
  %s6 = ssub.s32 1, %s4
  %s7 = scalar_select 0, %s6, %s4
  // Predicated region
  $region2: #{graph_conv.1} parent=0 // pred_check
    _
  $region3: #{graph_conv.1} parent=0 // pred_check_branch
    %9 = sbr.rel (0) target = $region5
  $region4: #{graph_conv.1} parent=0 // pred_region
    _
  $region5: #{graph_conv.1} parent=0 // pred_fallthru
    _
  // Predicated region
  $region6: #{graph_conv.1} parent=0 // pred_check
    _
  $region7: #{graph_conv.1} parent=0 // pred_check_branch
    %11 = sbr.rel (0) target = $region9
  $region8: #{graph_conv.1} parent=0 // pred_region
    _
  $region9: #{graph_conv.1} parent=0 // pred_fallthru
    _
  // Predicated region
  $region10: #{graph_conv.1} parent=0 // pred_check
    _
  $region11: #{graph_conv.1} parent=0 // pred_check_branch
    %13 = sbr.rel (0) target = $region13
  $region12: #{graph_conv.1} parent=0 // pred_region
    _
  $region13: #{graph_conv.1} parent=0 // pred_fallthru
    _
  %p14 = scmp.eq.s32.totalorder 0, 0
  // Predicated region
  $region14: #{graph_conv.1} parent=0 // pred_check
    %p15 = pneg %p14
  $region15: #{graph_conv.1} parent=0 // pred_check_branch
    %17 = sbr.rel (%p15) target = $region17
  $region16: #{graph_conv.1} parent=0 // pred_region
    %18 = vst [vmem:[#allocation2] sm:$0xff] 0.0
    %19 = vst [vmem:[#allocation2 + $0x8] sm:$0xff] 0.0
  $region17: #{graph_conv.1} parent=0 // pred_fallthru
    _
  %v20 = vld [vmem:[#allocation2] sm:$0xff]
  %v21 = vld [vmem:[#allocation2 + $0x8] sm:$0xff]
  %v22 = vld [vmem:[%s0] sm:$0xff]
  %v23 = vld [vmem:[%s0 + $0x8] sm:$0xff]
  %v24 = vld [vmem:[%s1] sm:$0xff]
  %v25 = vld [vmem:[%s1 + $0x8] sm:$0xff]
  %v26 = vld [vmem:[%s1 + $0x10] sm:$0xff]
  %v27 = vld [vmem:[%s1 + $0x18] sm:$0xff]
  %v28 = vld [vmem:[%s1 + $0x20] sm:$0xff]
  %v29 = vld [vmem:[%s1 + $0x28] sm:$0xff]
  %v30 = vld [vmem:[%s1 + $0x30] sm:$0xff]
  %v31 = vld [vmem:[%s1 + $0x38] sm:$0xff]
  %vm32 = vcmask 523264
  %v34 = vsel %vm32, %v22, 0
  %v37 = vsel %vm32, %v23, 0
  %39 = vmatprep.subr.mxu0 0.0
  %40 = vmatpush1.msra.mxu0 0.0
  %41 = vmatprep.subr.mxu0 0.0
  %42 = vmatpush1.msra.mxu0 0.0
  %43 = vmatprep.subr.mxu0 0.0
  %44 = vmatpush1.msra.mxu0 0.0
  %45 = vmatprep.subr.mxu0 0.0
  %46 = vmatpush1.msra.mxu0 0.0
  %47 = vmatprep.subr.mxu0 0.0
  %48 = vmatpush1.msra.mxu0 0.0
  %49 = vmatprep.subr.mxu0 0.0
  %50 = vmatpush1.msra.mxu0 0.0
  %51 = vmatprep.subr.mxu0 0.0
  %52 = vmatpush1.msra.mxu0 0.0
  %53 = vmatprep.subr.mxu0 0.0
  %54 = vmatpush1.msra.mxu0 0.0
  %55 = vmatprep.subr.mxu0 0.0
  %56 = vmatpush1.msra.mxu0 %v31
  %57 = vmatprep.subr.mxu0 0.0
  %58 = vmatpush1.msra.mxu0 %v30
  %59 = vmatprep.subr.mxu0 0.0
  %60 = vmatpush1.msra.mxu0 %v29
  %61 = vmatprep.subr.mxu0 0.0
  %62 = vmatpush1.msra.mxu0 %v28
  %63 = vmatprep.subr.mxu0 0.0
  %64 = vmatpush1.msra.mxu0 %v27
  %65 = vmatprep.subr.mxu0 0.0
  %66 = vmatpush1.msra.mxu0 %v26
  %67 = vmatprep.subr.mxu0 0.0
  %68 = vmatpush1.msra.mxu0 %v25
  %69 = vmatprep.subr.mxu0 0.0
  %70 = vmatpush1.msra.mxu0 %v24
  %71 = vmatprep.subr.mxu0 0.0
  %72 = vmatpush2.msra.mxu0 0.0
  %73 = vmatprep.subr.mxu0 0.0
  %74 = vmatpush2.msra.mxu0 0.0
  %75 = vmatprep.subr.mxu0 0.0
  %76 = vmatpush2.msra.mxu0 0.0
  %77 = vmatprep.subr.mxu0 0.0
  %78 = vmatpush2.msra.mxu0 0.0
  %79 = vmatprep.subr.mxu0 0.0
  %80 = vmatpush2.msra.mxu0 0.0
  %81 = vmatprep.subr.mxu0 0.0
  %82 = vmatpush2.msra.mxu0 0.0
  %83 = vmatprep.subr.mxu0 0.0
  %84 = vmatpush2.msra.mxu0 0.0
  %85 = vmatprep.subr.mxu0 0.0
  %86 = vmatpush2.msra.mxu0 0.0
  %87 = vmatprep.subr.mxu0 0.0
  %88 = vmatpush2.msra.mxu0 0.0
  %89 = vmatprep.subr.mxu0 0.0
  %90 = vmatpush2.msra.mxu0 0.0
  %91 = vmatprep.subr.mxu0 0.0
  %92 = vmatpush2.msra.mxu0 0.0
  %93 = vmatprep.subr.mxu0 0.0
  %94 = vmatpush2.msra.mxu0 0.0
  %95 = vmatprep.subr.mxu0 0.0
  %96 = vmatpush2.msra.mxu0 0.0
  %97 = vmatprep.subr.mxu0 0.0
  %98 = vmatpush2.msra.mxu0 0.0
  %99 = vmatprep.subr.mxu0 0.0
  %100 = vmatpush2.msra.mxu0 0.0
  %101 = vmatprep.subr.mxu0 0.0
  %102 = vmatpush2.msra.mxu0 0.0
  %103 = vmatprep.mubr.f32.mxu0 0.0
  %104 = vmatmul.mubr.f32.gmra.mxu0 %v34
  %v105 = vpop.f32.mrf.mxu0
  %v106 = vadd.f32 0.0, %v105
  %v107 = vpop.f32.mrf.mxu0
  %108 = vmatprep.mubr.f32.mxu0 0.0
  %109 = vmatmul.mubr.f32.gmra.mxu0 %v37
  %v110 = vpop.f32.mrf.mxu0
  %v111 = vadd.f32 0.0, %v110
  %v112 = vpop.f32.mrf.mxu0
  %113 = vdwg.mxu0
  %v114 = vadd.f32 %v20, %v106
  %v115 = vadd.f32 %v21, %v111
  %116 = vst [vmem:[#allocation2] sm:$0xff] %v114
  %117 = vst [vmem:[#allocation2 + $0x8] sm:$0xff] %v115
  // Predicated region
  $region18: #{graph_conv.1} parent=0 // pred_check
    %p118 = pneg %p14
  $region19: #{graph_conv.1} parent=0 // pred_check_branch
    %120 = sbr.rel (%p118) target = $region21
  $region20: #{graph_conv.1} parent=0 // pred_region
    %v121 = vld [vmem:[#allocation2] sm:$0xff]
    %v122 = vld [vmem:[#allocation2 + $0x8] sm:$0xff]
    %v123 = vld [vmem:[%s2] sm:$0x1]
    %v125 = vlaneseq
    %v126 = vshrl.u32 %v125, 7
    %v127 = vsub.s32 0, %v126
    %v128 = vrot.slane %v123, %v127
    %v130 = vadd.f32 %v121, %v128
    %v131 = vadd.f32 %v122, %v128
    %132 = vst [vmem:[%s3] sm:$0xff] %v130
    %133 = vst [vmem:[%s3 + $0x8] sm:$0xff] %v131
  $region21: #{graph_conv.1} parent=0 // pred_fallthru
    _
  // Predicated region
  $region22: #{graph_conv.1} parent=0 // pred_check
    _
  $region23: #{graph_conv.1} parent=0 // pred_check_branch
    %135 = sbr.rel (0) target = $region25
  $region24: #{graph_conv.1} parent=0 // pred_region
    _
  $region25: #{graph_conv.1} parent=0 // pred_fallthru
    _
  // Predicated region
  $region26: #{graph_conv.1} parent=0 // pred_check
    _
  $region27: #{graph_conv.1} parent=0 // pred_check_branch
    %137 = sbr.rel (0) target = $region29
  $region28: #{graph_conv.1} parent=0 // pred_region
    _
  $region29: #{graph_conv.1} parent=0 // pred_fallthru
    _

</llo_original>
